<compile_context>
chip_gen: v5e
topology: v5e:2x2
jax: 0.10.0
libtpu: 0.0.40
codegen_flags: <defaults>
</compile_context>

<pallas_src>
import math

import jax
import jax.numpy as jnp
from jax.experimental import pallas as pl
from jax.experimental.pallas import tpu as pltpu

LANES = 128
SUBLANES = 8
MAX_BLOCK_ROWS = 512  # (512, 128) f32 tile = 256 KiB -> tiny VMEM footprint on all chips.


def _round_up(a, b):
    return ((a + b - 1) // b) * b


def _qsgd_kernel(scale_ref, x_ref, u_ref, o_ref):
    """One (TR, 128) tile of the QSGD quantize pass.

    scale_ref : SMEM f32[2] = [s / norm, norm / (s * tau)]
    x_ref     : VMEM (TR, 128) input tile (original dtype)
    u_ref     : VMEM (TR, 128) uniform [0, 1) tile (f32)
    o_ref     : VMEM (TR, 128) output tile (original dtype)
    """
    x = x_ref[...].astype(jnp.float32)
    u = u_ref[...]
    q = jnp.abs(x) * scale_ref[0]          # s * |x| / norm   (no vector divide)
    xi = jnp.floor(q + u)                  # stochastic rounding
    mag = xi * scale_ref[1]                # xi * norm / (s * tau)
    out = jnp.where(x < 0, -mag, mag)      # copysign; x == 0 => mag == 0
    o_ref[...] = out.astype(o_ref.dtype)


def qsgd_compress(x, n_bits=4, seed=0):
    """Pallas TPU implementation of QSGDCompressor.forward."""
    if not isinstance(n_bits, int) or n_bits < 1:
        raise ValueError("n_bits must be an integer >= 1")
    s = (2 ** n_bits) - 1

    orig_shape = x.shape
    orig_dtype = x.dtype
    numel = x.size
    # tau = 1 + min(numel / s^2, sqrt(numel) / s)  -- static scalar
    tau = 1.0 + min(numel / (s ** 2), math.sqrt(numel) / s)

    # Global L2 norm: one bandwidth-optimal XLA reduce in the wrapper.
    x_flat = jnp.ravel(x)
    x_f32 = x_flat.astype(jnp.float32)
    norm = jnp.sqrt(jnp.sum(x_f32 * x_f32))
    scales = jnp.stack(
        [jnp.float32(s) / norm,                       # s / norm
         norm * jnp.float32(1.0 / (s * tau))]         # norm / (s * tau)
    ).astype(jnp.float32)

    # Lane-dense padded layout: (rows_padded, 128), rows_padded % block_rows == 0.
    rows = max(pl.cdiv(numel, LANES), SUBLANES)
    block_rows = min(MAX_BLOCK_ROWS, _round_up(rows, SUBLANES))
    rows_padded = _round_up(rows, block_rows)
    padded = rows_padded * LANES

    # Single fused pad (lax.pad) in the original dtype.
    x2d = jnp.pad(x_flat, (0, padded - numel)).reshape(rows_padded, LANES)

    # Uniform [0, 1) randoms (matches torch.rand_like), generated wrapper-side.
    u2d = jax.random.uniform(jax.random.PRNGKey(seed), (rows_padded, LANES),
                             dtype=jnp.float32)

    grid = (rows_padded // block_rows,)

    itemsize = jnp.dtype(orig_dtype).itemsize
    cost = pl.CostEstimate(
        flops=6 * numel,
        transcendentals=0,
        bytes_accessed=int(numel * (2 * itemsize + 4)),  # in + out + uniforms
    )

    out2d = pl.pallas_call(
        _qsgd_kernel,
        out_shape=jax.ShapeDtypeStruct((rows_padded, LANES), orig_dtype),
        grid=grid,
        in_specs=[
            pl.BlockSpec(memory_space=pltpu.MemorySpace.SMEM),      # scales
            pl.BlockSpec((block_rows, LANES), lambda i: (i, 0)),    # x tile
            pl.BlockSpec((block_rows, LANES), lambda i: (i, 0)),    # uniforms
        ],
        out_specs=pl.BlockSpec((block_rows, LANES), lambda i: (i, 0)),
        compiler_params=pltpu.CompilerParams(
            dimension_semantics=("parallel",),
            vmem_limit_bytes=32 * 1024 * 1024,
        ),
        cost_estimate=cost,
    )(scales, x2d, u2d)

    return out2d.reshape(-1)[:numel].reshape(orig_shape)


if __name__ == "__main__":
    key = jax.random.PRNGKey(0)
    # NCHW input, matching typical conv activations/gradients.
    x = jax.random.normal(key, (2, 4, 16, 16), dtype=jnp.float32)

    n_bits = 4
    out = qsgd_compress(x, n_bits=n_bits, seed=1234)
    out = jax.block_until_ready(out)

    # Sanity checks: shape/dtype preserved, values finite, quantization
    # invariant holds (|out| * (s*tau) / norm is an integer), signs match.
    s = (2 ** n_bits) - 1
    numel = x.size
    tau = 1.0 + min(numel / (s ** 2), math.sqrt(numel) / s)
    norm = jnp.sqrt(jnp.sum(x * x))
    xi = jnp.abs(out) * (s * tau) / norm
    assert out.shape == x.shape and out.dtype == x.dtype
    assert bool(jnp.all(jnp.isfinite(out)))
    assert bool(jnp.max(jnp.abs(xi - jnp.round(xi))) < 1e-3)
    assert bool(jnp.all((jnp.sign(out) == jnp.sign(x)) | (out == 0)))

    print("KERNEL_OK")
</pallas_src>

<mosaic_0001>
module attributes {stable_mosaic.version = 11 : i64} {
  func.func @_qsgd_kernel(%arg0: i32, %arg1: memref<2xf32, #tpu.memory_space<smem>>, %arg2: memref<16x128xf32, #tpu.memory_space<vmem>>, %arg3: memref<16x128xf32, #tpu.memory_space<vmem>>, %arg4: memref<16x128xf32, #tpu.memory_space<vmem>>) attributes {dimension_semantics = [#tpu.dimension_semantics<parallel>], iteration_bounds = array<i64: 1>, scalar_prefetch = 0 : i64, scratch_operands = 0 : i64, tpu.core_type = #tpu.core_type<tc>, window_params = [{transform_indices = @transform_0, window_bounds = array<i64: 2>}, {transform_indices = @transform_1, window_bounds = array<i64: 16, 128>}, {transform_indices = @transform_2, window_bounds = array<i64: 16, 128>}, {transform_indices = @transform_3, window_bounds = array<i64: 16, 128>}]} {
    %c0 = arith.constant 0 : index
    %c0_0 = arith.constant 0 : index
    %0 = vector.load %arg2[%c0, %c0_0] : memref<16x128xf32, #tpu.memory_space<vmem>>, vector<16x128xf32>
    %c0_1 = arith.constant 0 : index
    %c0_2 = arith.constant 0 : index
    %1 = vector.load %arg3[%c0_1, %c0_2] : memref<16x128xf32, #tpu.memory_space<vmem>>, vector<16x128xf32>
    %2 = math.absf %0 : vector<16x128xf32>
    %c0_3 = arith.constant 0 : index
    %3 = memref.load %arg1[%c0_3] : memref<2xf32, #tpu.memory_space<smem>>
    %4 = vector.broadcast %3 : f32 to vector<16x128xf32>
    %5 = arith.mulf %2, %4 : vector<16x128xf32>
    %6 = arith.addf %5, %1 : vector<16x128xf32>
    %7 = math.floor %6 : vector<16x128xf32>
    %c1 = arith.constant 1 : index
    %8 = memref.load %arg1[%c1] : memref<2xf32, #tpu.memory_space<smem>>
    %9 = vector.broadcast %8 : f32 to vector<16x128xf32>
    %10 = arith.mulf %7, %9 : vector<16x128xf32>
    %cst = arith.constant 0.000000e+00 : f32
    %11 = vector.broadcast %cst : f32 to vector<16x128xf32>
    %12 = arith.cmpf olt, %0, %11 : vector<16x128xf32>
    %cst_4 = arith.constant 0.000000e+00 : f32
    %13 = vector.broadcast %cst_4 : f32 to vector<16x128xf32>
    %14 = arith.subf %13, %10 : vector<16x128xf32>
    %15 = arith.select %12, %14, %10 : vector<16x128xi1>, vector<16x128xf32>
    %c0_5 = arith.constant 0 : index
    %c0_6 = arith.constant 0 : index
    %16 = vector.load %arg4[%c0_5, %c0_6] : memref<16x128xf32, #tpu.memory_space<vmem>>, vector<16x128xf32>
    tpu.vector_store %arg4[%c0_5, %c0_6], %15 {strides = array<i32>} : memref<16x128xf32, #tpu.memory_space<vmem>>, vector<16x128xf32>,
    return
  }
  func.func @transform_0(%arg0: i32) -> i32 {
    %c0_i32 = arith.constant 0 : i32
    %c0_i32_0 = arith.constant 0 : i32
    return %c0_i32 : i32
  }
  func.func @transform_1(%arg0: i32) -> (i32, i32) {
    %c0_i32 = arith.constant 0 : i32
    %c0_i32_0 = arith.constant 0 : i32
    return %arg0, %c0_i32 : i32, i32
  }
  func.func @transform_2(%arg0: i32) -> (i32, i32) {
    %c0_i32 = arith.constant 0 : i32
    %c0_i32_0 = arith.constant 0 : i32
    return %arg0, %c0_i32 : i32, i32
  }
  func.func @transform_3(%arg0: i32) -> (i32, i32) {
    %c0_i32 = arith.constant 0 : i32
    %c0_i32_0 = arith.constant 0 : i32
    return %arg0, %c0_i32 : i32, i32
  }
}

</mosaic_0001>

<llo_original>
// kernel: tpu_custom_call.1
$region0: #{tpu_custom_call.1}
  #allocation0 [shape = 'u32[]', space=smem, size = 0x4, offset = 0x4, fixed_abs, tag = 'smem constant byte address 0x4 - core index']
  #allocation1 [shape = 'u32[72,128]{1,0:T(1,128)}', space=vmem, size = 0x9000, scoped, tag = 'internal scratch']
  %s0 = inlined_call_operand.hbm [shape: f32[2], index: 0, kind: input, shape index: {}]
  %s1 = inlined_call_operand.hbm [shape: f32[16,128], index: 1, kind: input, shape index: {}]
  %s2 = inlined_call_operand.hbm [shape: f32[16,128], index: 2, kind: input, shape index: {}]
  %s3 = inlined_call_operand.hbm [shape: f32[16,128], index: 3, kind: output, shape index: {}]
  %s4 = sld [smem:[#allocation0]]
  $region34: #{tpu_custom_call.1} parent=0
    _
  %s6 = ssub.s32 1, %s4
  %s7 = scalar_select 0, %s6, %s4
  $region1: #{tpu_custom_call.1} parent=0
    #allocation2 [shape = 'u8[512]{0}', space=smem, size = 0x200, scoped, tag = 'input window, operand 0, single buffered']
    #allocation3 [shape = 's32[1]{0}', space=sflag, size = 0x4, scoped, tag = 'scoped memory for tpu_custom_call.1']
    #allocation4 [shape = 's32[1]{0}', space=sflag, size = 0x4, scoped, tag = 'scoped memory for tpu_custom_call.1']
    #allocation5 [shape = 's32[1]{0}', space=sflag, size = 0x4, scoped, tag = 'scoped memory for tpu_custom_call.1']
    #allocation6 [shape = 'u8[8192]{0}', space=vmem, size = 0x2000, scoped, tag = 'input window, operand 1, single buffered']
    #allocation7 [shape = 'u8[8192]{0}', space=vmem, size = 0x2000, scoped, tag = 'input window, operand 2, single buffered']
    #allocation8 [shape = 's32[1]{0}', space=sflag, size = 0x4, scoped, tag = 'scoped memory for tpu_custom_call.1']
    #allocation9 [shape = 'u8[8192]{0}', space=vmem, size = 0x2000, scoped, tag = 'output window, operand 0, single buffered']
    %8 = vsyncpa [#allocation5], 0
    %9 = vsyncpa [#allocation3], 0
    %10 = vsyncpa [#allocation8], 0
    %11 = vsyncpa [#allocation4], 0
    // Predicated region
    $region2: #{tpu_custom_call.1} parent=1 // pred_check
      _
    $region3: #{tpu_custom_call.1} parent=1 // pred_check_branch
      %13 = sbr.rel (0) target = $region5
    $region4: #{tpu_custom_call.1} parent=1 // pred_region
      %15 = vsyncadd [#allocation5], 0
      %s17 = sshll.u32 %s0, 4
      %s18 = int_to_ptr.hbm [resolvable:$true] %s17
      %20 = dma.hbm_to_smem %s18, 16, [#allocation2], [#allocation5]
    $region5: #{tpu_custom_call.1} parent=1 // pred_fallthru
      _
    // Predicated region
    $region6: #{tpu_custom_call.1} parent=1 // pred_check
      _
    $region7: #{tpu_custom_call.1} parent=1 // pred_check_branch
      %22 = sbr.rel (0) target = $region9
    $region8: #{tpu_custom_call.1} parent=1 // pred_region
      %24 = vsyncadd [#allocation3], 0
      %s25 = sshll.u32 %s1, 4
      %s26 = int_to_ptr.hbm [resolvable:$true] %s25
      %s27 = sshll.u32 [#allocation6], 4
      %s28 = int_to_ptr.vmem [resolvable:$true] %s27
      %33 = dma.hbm_to_vmem [thread:$0]  %s26, 256, %s28, [#allocation3], 128, 128, 8
    $region9: #{tpu_custom_call.1} parent=1 // pred_fallthru
      _
    // Predicated region
    $region10: #{tpu_custom_call.1} parent=1 // pred_check
      _
    $region11: #{tpu_custom_call.1} parent=1 // pred_check_branch
      %35 = sbr.rel (0) target = $region13
    $region12: #{tpu_custom_call.1} parent=1 // pred_region
      %37 = vsyncadd [#allocation8], 0
      %s38 = sshll.u32 %s2, 4
      %s39 = int_to_ptr.hbm [resolvable:$true] %s38
      %s40 = sshll.u32 [#allocation7], 4
      %s41 = int_to_ptr.vmem [resolvable:$true] %s40
      %46 = dma.hbm_to_vmem [thread:$0]  %s39, 256, %s41, [#allocation8], 128, 128, 8
    $region13: #{tpu_custom_call.1} parent=1 // pred_fallthru
      _
    // Predicated region
    $region14: #{tpu_custom_call.1} parent=1 // pred_check
      _
    $region15: #{tpu_custom_call.1} parent=1 // pred_check_branch
      %48 = sbr.rel (0) target = $region17
    $region16: #{tpu_custom_call.1} parent=1 // pred_region
      %50 = dma.done [#allocation5], 16
    $region17: #{tpu_custom_call.1} parent=1 // pred_fallthru
      _
    // Predicated region
    $region18: #{tpu_custom_call.1} parent=1 // pred_check
      _
    $region19: #{tpu_custom_call.1} parent=1 // pred_check_branch
      %52 = sbr.rel (0) target = $region21
    $region20: #{tpu_custom_call.1} parent=1 // pred_region
      %54 = dma.done [#allocation3], 256
    $region21: #{tpu_custom_call.1} parent=1 // pred_fallthru
      _
    // Predicated region
    $region22: #{tpu_custom_call.1} parent=1 // pred_check
      _
    $region23: #{tpu_custom_call.1} parent=1 // pred_check_branch
      %56 = sbr.rel (0) target = $region25
    $region24: #{tpu_custom_call.1} parent=1 // pred_region
      %58 = dma.done [#allocation8], 256
    $region25: #{tpu_custom_call.1} parent=1 // pred_fallthru
      _
    %59 = sfence
    %v60 = vld [vmem:[#allocation6] sm:$0xff]
    %v61 = vld [vmem:[#allocation6 + $0x8] sm:$0xff]
    %v62 = vld [vmem:[#allocation7] sm:$0xff]
    %v63 = vld [vmem:[#allocation7 + $0x8] sm:$0xff]
    %v64 = vand.u32 2147483647, %v60
    %v65 = vand.u32 2147483647, %v61
    %s66 = sld [smem:[#allocation2]]
    %v67 = vstv %s66
    %v68 = vmul.f32 %v64, %v67
    %v69 = vmul.f32 %v65, %v67
    %v70 = vadd.f32 %v68, %v62
    %v71 = vadd.f32 %v69, %v63
    %v72 = vfloor.f32 %v70
    %v73 = vfloor.f32 %v71
    %s74 = sld [smem:[#allocation2 + $0x1]]
    %v75 = vstv %s74
    %v76 = vmul.f32 %v72, %v75
    %v77 = vmul.f32 %v73, %v75
    %vm78 = vcmp.lt.f32.partialorder %v60, 0.0
    %vm79 = vcmp.lt.f32.partialorder %v61, 0.0
    %v80 = vsub.f32 0.0, %v76
    %v81 = vsub.f32 0.0, %v77
    %v82 = vsel %vm78, %v80, %v76
    %v83 = vsel %vm79, %v81, %v77
    %84 = vst [vmem:[#allocation9] sm:$0xff] %v82
    %85 = vst [vmem:[#allocation9 + $0x8] sm:$0xff] %v83
    // Predicated region
    $region26: #{tpu_custom_call.1} parent=1 // pred_check
      _
    $region27: #{tpu_custom_call.1} parent=1 // pred_check_branch
      %87 = sbr.rel (0) target = $region29
    $region28: #{tpu_custom_call.1} parent=1 // pred_region
      %89 = vsyncadd [#allocation4], 0
      %s90 = sshll.u32 [#allocation9], 4
      %s91 = int_to_ptr.vmem [resolvable:$true] %s90
      %s92 = sshll.u32 %s3, 4
      %s93 = int_to_ptr.hbm [resolvable:$true] %s92
      %98 = dma.vmem_to_hbm [thread:$0]  %s91, 256, %s93, [#allocation4], 128, 128, 8
    $region29: #{tpu_custom_call.1} parent=1 // pred_fallthru
      _
    // Predicated region
    $region30: #{tpu_custom_call.1} parent=1 // pred_check
      _
    $region31: #{tpu_custom_call.1} parent=1 // pred_check_branch
      %100 = sbr.rel (0) target = $region33
    $region32: #{tpu_custom_call.1} parent=1 // pred_region
      %102 = dma.done [#allocation4], 256
    $region33: #{tpu_custom_call.1} parent=1 // pred_fallthru
      _
    %103 = vsyncpa [#allocation3], 1
    %104 = vsyncpa [#allocation8], 1
    %105 = vsyncpa [#allocation4], 1
    %106 = vsyncpa [#allocation5], 1

</llo_original>
